<compile_context>
chip_gen: v7x
topology: tpu7x:2x2x1
jax: 0.10.0
libtpu: 0.0.40
codegen_flags: <defaults>
</compile_context>

<pallas_src>
import functools

import jax
import jax.numpy as jnp
from jax import lax
from jax.experimental import pallas as pl
from jax.experimental.pallas import tpu as pltpu

_VMEM_LIMIT_BYTES = 48 * 1024 * 1024


def _pick_row_tile(n_rows, requested):
    """Largest row tile <= requested that divides N (multiple of 16 sublanes)."""
    for t in (1024, 512, 256, 128, 64, 32, 16):
        if t <= requested and t <= n_rows and n_rows % t == 0:
            return t
    return n_rows  # fall back to a single full-height tile


# ------------------------------ GNN layer -----------------------------------


def _gnn_layer_kernel(feat_ref, w_ref, adj_ref, out_ref, *, active):
    # support = act(feat @ W^T): (N, d_out). Recomputed per row tile — the tiny
    # (N x d_in x d_out) matmul + tanh is fully hidden under the adj tile DMA
    # and keeps the row axis stateless (safe for "parallel" semantics).
    support = jnp.dot(feat_ref[...], w_ref[...],
                      preferred_element_type=jnp.float32)
    if active:
        support = jnp.tanh(support)
    # out_tile = adj_tile @ support  (bf16 operands on the MXU, f32 accumulate).
    out_ref[...] = jnp.dot(
        adj_ref[...], support.astype(adj_ref.dtype),
        preferred_element_type=jnp.float32).astype(out_ref.dtype)


def _gnn_layer(feat, w_t, adj_lowp, *, active, tm):
    n, d_in = feat.shape
    d_out = w_t.shape[1]
    return pl.pallas_call(
        functools.partial(_gnn_layer_kernel, active=active),
        out_shape=jax.ShapeDtypeStruct((n, d_out), jnp.float32),
        grid=(n // tm,),
        in_specs=[
            pl.BlockSpec((n, d_in), lambda i: (0, 0)),      # resident features
            pl.BlockSpec((d_in, d_out), lambda i: (0, 0)),  # resident weight
            pl.BlockSpec((tm, n), lambda i: (i, 0)),        # streamed adj rows
        ],
        out_specs=pl.BlockSpec((tm, d_out), lambda i: (i, 0)),
        compiler_params=pltpu.CompilerParams(
            dimension_semantics=("parallel",),
            vmem_limit_bytes=_VMEM_LIMIT_BYTES),
    )(feat, w_t, adj_lowp)


# ----------------------- adjacency reconstruction ---------------------------


def _adj_hat_kernel(zi_full_ref, zh_full_ref, zi_rows_ref, zh_rows_ref, out_ref):
    # Contract the shared last axis => A @ B^T without materializing B^T.
    dn = (((1,), (1,)), ((), ()))
    g1 = lax.dot_general(zi_rows_ref[...], zi_full_ref[...], dn,
                         preferred_element_type=jnp.float32)
    g2 = lax.dot_general(zh_rows_ref[...], zh_full_ref[...], dn,
                         preferred_element_type=jnp.float32)
    out_ref[...] = (jax.nn.sigmoid(g1) + jax.nn.sigmoid(g2)).astype(out_ref.dtype)


def _adj_hat(z_igae, z_hat, *, tm):
    n, d_i = z_igae.shape
    d_h = z_hat.shape[1]
    return pl.pallas_call(
        _adj_hat_kernel,
        out_shape=jax.ShapeDtypeStruct((n, n), jnp.float32),
        grid=(n // tm,),
        in_specs=[
            pl.BlockSpec((n, d_i), lambda i: (0, 0)),   # resident z_igae
            pl.BlockSpec((n, d_h), lambda i: (0, 0)),   # resident z_hat
            pl.BlockSpec((tm, d_i), lambda i: (i, 0)),  # this tile's z_igae rows
            pl.BlockSpec((tm, d_h), lambda i: (i, 0)),  # this tile's z_hat rows
        ],
        # (TM, N) output tile: lane-dense stores (N is the full last dim).
        out_specs=pl.BlockSpec((tm, n), lambda i: (i, 0)),
        compiler_params=pltpu.CompilerParams(
            dimension_semantics=("parallel",),
            vmem_limit_bytes=_VMEM_LIMIT_BYTES),
    )(z_igae, z_hat, z_igae, z_hat)


# --------------------------------- IGAE --------------------------------------


def igae_forward(x, adj, enc_weights, dec_weights, *, tm=512):
    """IGAE forward: returns (z_igae, z_hat, adj_hat).

    x: (N, n_input) f32; adj: (N, N) f32 dense (e.g. row-normalized);
    enc_weights / dec_weights: 4 weights each, PyTorch layout (out_f, in_f).
    Encoder layers use tanh (active=True); decoder layers are linear.
    """
    n = x.shape[0]
    tm = _pick_row_tile(n, tm)
    # TODO(synk): torch.spmm's sparse adjacency has no sparse Pallas equivalent;
    # adj is handled densely (bf16-streamed) here.
    adj_lowp = adj.astype(jnp.bfloat16)  # cast once: halves the dominant HBM stream

    z = x
    for w in enc_weights:                                   # encoder (tanh)
        z = _gnn_layer(z, jnp.transpose(w), adj_lowp, active=True, tm=tm)
    z_igae = z
    for w in dec_weights:                                   # decoder (linear)
        z = _gnn_layer(z, jnp.transpose(w), adj_lowp, active=False, tm=tm)
    z_hat = z

    adj_hat = _adj_hat(z_igae, z_hat, tm=tm)
    return z_igae, z_hat, adj_hat


def _xavier_uniform(key, out_f, in_f):
    # matches torch.nn.init.xavier_uniform_ for a (out_f, in_f) weight
    limit = jnp.sqrt(6.0 / (in_f + out_f))
    return jax.random.uniform(key, (out_f, in_f), jnp.float32, -limit, limit)


if __name__ == "__main__":
    # Small, module-consistent shapes.
    N = 256                 # nodes
    n_input = 32
    gae_n_enc = (32, 16, 16, 8)       # gae_n_enc_1..4
    gae_n_dec = (8, 16, 16, 32)       # gae_n_dec_1..4 (dec_1 == enc_4)

    key = jax.random.PRNGKey(0)
    keys = jax.random.split(key, 10)

    x = jax.random.normal(keys[0], (N, n_input), jnp.float32)
    # Row-normalized dense adjacency (dense stand-in for torch.spmm's sparse adj).
    adj_raw = jax.random.uniform(keys[1], (N, N), jnp.float32)
    adj = adj_raw / jnp.sum(adj_raw, axis=1, keepdims=True)

    enc_in = (n_input,) + gae_n_enc[:-1]
    enc_out = gae_n_enc
    enc_ws = tuple(_xavier_uniform(k, o, i)
                   for k, i, o in zip(keys[2:6], enc_in, enc_out))

    dec_in = gae_n_dec
    dec_out = gae_n_dec[1:] + (n_input,)
    dec_ws = tuple(_xavier_uniform(k, o, i)
                   for k, i, o in zip(keys[6:10], dec_in, dec_out))

    # tm=64 -> 4 row tiles at N=256, exercising the pipelined grid.
    z_igae, z_hat, adj_hat = igae_forward(x, adj, enc_ws, dec_ws, tm=64)
    jax.block_until_ready((z_igae, z_hat, adj_hat))

    # Pure-JAX f32 reference of the same semantics.
    def ref_layer(feat, w, active):
        s = feat @ w.T
        if active:
            s = jnp.tanh(s)
        return adj @ s

    z_ref = x
    for w in enc_ws:
        z_ref = ref_layer(z_ref, w, True)
    z_igae_ref = z_ref
    for w in dec_ws:
        z_ref = ref_layer(z_ref, w, False)
    z_hat_ref = z_ref
    adj_hat_ref = (jax.nn.sigmoid(z_igae_ref @ z_igae_ref.T)
                   + jax.nn.sigmoid(z_hat_ref @ z_hat_ref.T))

    # bf16-streamed adj (f32 accumulation) -> loosened tolerances.
    assert jnp.allclose(z_igae, z_igae_ref, atol=3e-2, rtol=3e-2)
    assert jnp.allclose(z_hat, z_hat_ref, atol=3e-2, rtol=3e-2)
    assert jnp.allclose(adj_hat, adj_hat_ref, atol=3e-2, rtol=3e-2)
    assert z_igae.shape == (N, gae_n_enc[-1])
    assert z_hat.shape == (N, n_input)
    assert adj_hat.shape == (N, N)

    print("KERNEL_OK")
</pallas_src>

<mosaic_0001>
module attributes {stable_mosaic.version = 11 : i64} {
  func.func @_gnn_layer_kernel(%arg0: i32, %arg1: memref<256x32xf32, #tpu.memory_space<vmem>>, %arg2: memref<32x32xf32, #tpu.memory_space<vmem>>, %arg3: memref<64x256xbf16, #tpu.memory_space<vmem>>, %arg4: memref<64x32xf32, #tpu.memory_space<vmem>>) attributes {dimension_semantics = [#tpu.dimension_semantics<parallel>], iteration_bounds = array<i64: 4>, scalar_prefetch = 0 : i64, scratch_operands = 0 : i64, tpu.core_type = #tpu.core_type<tc>, window_params = [{pipeline_mode = #tpu.pipeline_mode<synchronous>, transform_indices = @transform_0, window_bounds = array<i64: 256, 32>}, {pipeline_mode = #tpu.pipeline_mode<synchronous>, transform_indices = @transform_1, window_bounds = array<i64: 32, 32>}, {transform_indices = @transform_2, window_bounds = array<i64: 64, 256>}, {transform_indices = @transform_3, window_bounds = array<i64: 64, 32>}]} {
    %c0 = arith.constant 0 : index
    %c0_0 = arith.constant 0 : index
    %0 = vector.load %arg1[%c0, %c0_0] : memref<256x32xf32, #tpu.memory_space<vmem>>, vector<256x32xf32>
    %c0_1 = arith.constant 0 : index
    %c0_2 = arith.constant 0 : index
    %1 = vector.load %arg2[%c0_1, %c0_2] : memref<32x32xf32, #tpu.memory_space<vmem>>, vector<32x32xf32>
    %cst = arith.constant dense<0.000000e+00> : vector<256x32xf32>
    %2 = tpu.matmul %0, %1, %cst {dimension_numbers = #tpu.dot_dimension_numbers<[1], [0], [0], [1], [0, 0, 1, 1], [], []>} : vector<256x32xf32>, vector<32x32xf32>, vector<256x32xf32> -> vector<256x32xf32>
    %3 = math.tanh %2 : vector<256x32xf32>
    %c0_3 = arith.constant 0 : index
    %c0_4 = arith.constant 0 : index
    %4 = vector.load %arg3[%c0_3, %c0_4] : memref<64x256xbf16, #tpu.memory_space<vmem>>, vector<64x256xbf16>
    %5 = arith.truncf %3 : vector<256x32xf32> to vector<256x32xbf16>
    %cst_5 = arith.constant dense<0.000000e+00> : vector<64x32xf32>
    %6 = tpu.matmul %4, %5, %cst_5 {dimension_numbers = #tpu.dot_dimension_numbers<[1], [0], [0], [1], [0, 0, 1, 1], [], []>} : vector<64x256xbf16>, vector<256x32xbf16>, vector<64x32xf32> -> vector<64x32xf32>
    %c0_6 = arith.constant 0 : index
    %c0_7 = arith.constant 0 : index
    %7 = vector.load %arg4[%c0_6, %c0_7] : memref<64x32xf32, #tpu.memory_space<vmem>>, vector<64x32xf32>
    tpu.vector_store %arg4[%c0_6, %c0_7], %6 {strides = array<i32>} : memref<64x32xf32, #tpu.memory_space<vmem>>, vector<64x32xf32>,
    return
  }
  func.func @transform_0(%arg0: i32) -> (i32, i32) {
    %c0_i32 = arith.constant 0 : i32
    %c0_i32_0 = arith.constant 0 : i32
    %c0_i32_1 = arith.constant 0 : i32
    return %c0_i32, %c0_i32_0 : i32, i32
  }
  func.func @transform_1(%arg0: i32) -> (i32, i32) {
    %c0_i32 = arith.constant 0 : i32
    %c0_i32_0 = arith.constant 0 : i32
    %c0_i32_1 = arith.constant 0 : i32
    return %c0_i32, %c0_i32_0 : i32, i32
  }
  func.func @transform_2(%arg0: i32) -> (i32, i32) {
    %c0_i32 = arith.constant 0 : i32
    %c0_i32_0 = arith.constant 0 : i32
    return %arg0, %c0_i32 : i32, i32
  }
  func.func @transform_3(%arg0: i32) -> (i32, i32) {
    %c0_i32 = arith.constant 0 : i32
    %c0_i32_0 = arith.constant 0 : i32
    return %arg0, %c0_i32 : i32, i32
  }
}

</mosaic_0001>

<llo_original>
// kernel: tpu_custom_call.1
$region0: #{tpu_custom_call.1}
  #allocation0 [shape = 'u32[]', space=smem, size = 0x4, offset = 0x4, fixed_abs, tag = 'smem constant byte address 0x4 - core index']
  #allocation1 [shape = 'u32[144,128]{1,0:T(1,128)}', space=vmem, size = 0x12000, scoped, tag = 'internal scratch']
  %s0 = inlined_call_operand.vmem [shape: f32[256,32], index: 0, kind: input, shape index: {}]
  %s1 = inlined_call_operand.vmem [shape: f32[32,32], index: 1, kind: input, shape index: {}]
  %s2 = inlined_call_operand.vmem [shape: bf16[256,256], index: 2, kind: input, shape index: {}]
  %s3 = inlined_call_operand.vmem [shape: f32[256,32], index: 3, kind: output, shape index: {}]
  %s4 = sld [smem:[#allocation0]]
  $region45: #{tpu_custom_call.1} parent=0
    _
  %s6 = ssub.s32 1, %s4
  %s7 = scalar_select 0, %s6, %s4
  loop: start=0, step=1, limit=6
  $region2: #{tpu_custom_call.1} parent=0 // loop_pre_header
    _
  $region3: #{tpu_custom_call.1} parent=0 // loop_header
    %s9 = sphi 0, %s13
    %p10 = scmp.ge.s32.totalorder %s9, 6
    %s17 = sphi 0, %s17
    %s19 = sphi 0, %s17
    %s20 = sphi 0, %s19
    %s34 = sphi 0, %s20
    %s38 = sphi 0, %s38
    %s40 = sphi 0, %s38
    %s41 = sphi 0, %s40
    %s55 = sphi 0, %s41
    %s61 = sphi 0, %s63
    %s64 = sphi 0, %s61
    %s65 = sphi 0, %s64
    %s81 = sphi 0, %s65
    %s87 = sphi 0, %s89
    %s90 = sphi 0, %s87
    %s91 = sphi 0, %s90
    %s107 = sphi 0, %s91
  $region4: #{tpu_custom_call.1} parent=0 // loop_header_branch
    %12 = sbr.rel (%p10) target = $region8
  $region5: #{tpu_custom_call.1} parent=0 // loop_body
    %s14 = ssub.s32 %s9, 1
    %s15 = ssub.s32 %s9, 2
    %s16 = sadd.s32 %s9, 1
    %s18 = sadd.s32 %s17, 1
    %p21 = scmp.eq.s32.totalorder %s9, 3
    %p22 = scmp.ne.s32.totalorder %s17, %s19
    %p23 = scmp.eq.s32.totalorder %s9, 0
    %p24 = por %p22, %p23
    %p25 = scmp.ne.s32.totalorder %s17, %s19
    %p26 = scmp.eq.s32.totalorder %s14, 3
    %p27 = por %p25, %p26
    %p28 = scmp.ne.s32.totalorder %s19, %s20
    %p29 = scmp.eq.s32.totalorder %s14, 0
    %p30 = por %p28, %p29
    %p31 = scmp.ne.s32.totalorder %s19, %s20
    %p32 = scmp.eq.s32.totalorder %s15, 3
    %p33 = por %p31, %p32
    %p35 = scmp.ne.s32.totalorder %s20, %s34
    %p36 = scmp.eq.s32.totalorder %s15, 0
    %p37 = por %p35, %p36
    %s39 = sadd.s32 %s38, 1
    %p42 = scmp.eq.s32.totalorder %s9, 3
    %p43 = scmp.ne.s32.totalorder %s38, %s40
    %p44 = scmp.eq.s32.totalorder %s9, 0
    %p45 = por %p43, %p44
    %p46 = scmp.ne.s32.totalorder %s38, %s40
    %p47 = scmp.eq.s32.totalorder %s14, 3
    %p48 = por %p46, %p47
    %p49 = scmp.ne.s32.totalorder %s40, %s41
    %p50 = scmp.eq.s32.totalorder %s14, 0
    %p51 = por %p49, %p50
    %p52 = scmp.ne.s32.totalorder %s40, %s41
    %p53 = scmp.eq.s32.totalorder %s15, 3
    %p54 = por %p52, %p53
    %p56 = scmp.ne.s32.totalorder %s41, %s55
    %p57 = scmp.eq.s32.totalorder %s15, 0
    %p58 = por %p56, %p57
    %s59 = ssub.s32 %s9, %s16
    %p60 = scmp.eq.s32.totalorder %s59, 0
    %s62 = sadd.s32 %s61, 1
    %s63 = scalar_select %p60, %s61, %s62
    %p66 = pneg %p60
    %p67 = scmp.eq.s32.totalorder %s9, 3
    %p68 = por %p66, %p67
    %p69 = scmp.ne.s32.totalorder %s61, %s64
    %p70 = scmp.eq.s32.totalorder %s9, 0
    %p71 = por %p69, %p70
    %p72 = scmp.ne.s32.totalorder %s61, %s64
    %p73 = scmp.eq.s32.totalorder %s14, 3
    %p74 = por %p72, %p73
    %p75 = scmp.ne.s32.totalorder %s64, %s65
    %p76 = scmp.eq.s32.totalorder %s14, 0
    %p77 = por %p75, %p76
    %p78 = scmp.ne.s32.totalorder %s64, %s65
    %p79 = scmp.eq.s32.totalorder %s15, 3
    %p80 = por %p78, %p79
    %p82 = scmp.ne.s32.totalorder %s65, %s81
    %p83 = scmp.eq.s32.totalorder %s15, 0
    %p84 = por %p82, %p83
    %s85 = ssub.s32 %s9, %s16
    %p86 = scmp.eq.s32.totalorder %s85, 0
    %s88 = sadd.s32 %s87, 1
    %s89 = scalar_select %p86, %s87, %s88
    %p92 = pneg %p86
    %p93 = scmp.eq.s32.totalorder %s9, 3
    %p94 = por %p92, %p93
    %p95 = scmp.ne.s32.totalorder %s87, %s90
    %p96 = scmp.eq.s32.totalorder %s9, 0
    %p97 = por %p95, %p96
    %p98 = scmp.ne.s32.totalorder %s87, %s90
    %p99 = scmp.eq.s32.totalorder %s14, 3
    %p100 = por %p98, %p99
    %p101 = scmp.ne.s32.totalorder %s90, %s91
    %p102 = scmp.eq.s32.totalorder %s14, 0
    %p103 = por %p101, %p102
    %p104 = scmp.ne.s32.totalorder %s90, %s91
    %p105 = scmp.eq.s32.totalorder %s15, 3
    %p106 = por %p104, %p105
    %p108 = scmp.ne.s32.totalorder %s91, %s107
    %p109 = scmp.eq.s32.totalorder %s15, 0
    %p110 = por %p108, %p109
    %p111 = scmp.le.s32.totalorder 1, %s9
    %p112 = scmp.lt.s32.totalorder %s9, 5
    %p113 = pnand %p111, %p112
    %p114 = pneg %p113
    // Predicated region
    $region9: #{tpu_custom_call.1} parent=5 // pred_check
      _
    $region10: #{tpu_custom_call.1} parent=5 // pred_check_branch
      %116 = sbr.rel (%p113) target = $region12
    $region11: #{tpu_custom_call.1} parent=5 // pred_region
      %s117 = ssub.s32 %s9, 1
      // Predicated region
      $region13: #{tpu_custom_call.1} parent=11 // pred_check
        %p118 = pneg %p30
      $region14: #{tpu_custom_call.1} parent=11 // pred_check_branch
        %120 = sbr.rel (%p118) target = $region16
      $region15: #{tpu_custom_call.1} parent=11 // pred_region
        _
      $region16: #{tpu_custom_call.1} parent=11 // pred_fallthru
        _
      // Predicated region
      $region17: #{tpu_custom_call.1} parent=11 // pred_check
        %p121 = pneg %p51
      $region18: #{tpu_custom_call.1} parent=11 // pred_check_branch
        %123 = sbr.rel (%p121) target = $region20
      $region19: #{tpu_custom_call.1} parent=11 // pred_region
        _
      $region20: #{tpu_custom_call.1} parent=11 // pred_fallthru
        _
    $region12: #{tpu_custom_call.1} parent=5 // pred_fallthru
      _
    %p124 = scmp.lt.s32.totalorder %s9, 4
    // Predicated region
    $region21: #{tpu_custom_call.1} parent=5 // pred_check
      %p125 = pneg %p124
    $region22: #{tpu_custom_call.1} parent=5 // pred_check_branch
      %127 = sbr.rel (%p125) target = $region24
    $region23: #{tpu_custom_call.1} parent=5 // pred_region
      // Predicated region
      $region25: #{tpu_custom_call.1} parent=23 // pred_check
        %p128 = pneg %p71
      $region26: #{tpu_custom_call.1} parent=23 // pred_check_branch
        %130 = sbr.rel (%p128) target = $region28
      $region27: #{tpu_custom_call.1} parent=23 // pred_region
        %s131 = smul.u32 8, %s9
        %p132 = scmp.lt.s32.totalorder %s131, 31
        %s133 = scalar_select %p132, %s131, 31
        %s134 = smul.addr %s133, 2
        %s135 = smul.addr %s134, 4
        %s136 = scalar_lea.vmem %s2, %s135
        %s137 = smul.u32 8, %s9
      $region28: #{tpu_custom_call.1} parent=23 // pred_fallthru
        _
    $region24: #{tpu_custom_call.1} parent=5 // pred_fallthru
      _
    %p138 = scmp.le.s32.totalorder 1, %s9
    %p139 = scmp.lt.s32.totalorder %s9, 5
    %p140 = pnand %p138, %p139
    %p141 = pneg %p140
    // Predicated region
    $region29: #{tpu_custom_call.1} parent=5 // pred_check
      _
    $region30: #{tpu_custom_call.1} parent=5 // pred_check_branch
      %143 = sbr.rel (%p140) target = $region32
    $region31: #{tpu_custom_call.1} parent=5 // pred_region
      %s144 = ssub.s32 %s9, 1
      %p145 = pneg %p30
      %p146 = pneg %p27
      %p147 = pneg %p51
      %p148 = pneg %p48
      %s149 = smul.u32 8, %s14
      %p150 = scmp.lt.s32.totalorder %s149, 31
      %s151 = scalar_select %p150, %s149, 31
      %s152 = smul.addr %s151, 2
      %s153 = smul.addr %s152, 4
      %s154 = scalar_lea.vmem %s2, %s153
      %p155 = pneg %p77
      %p156 = pneg %p74
      %p157 = pneg %p103
      %p158 = pneg %p100
      %s159 = smul.u32 8, %s14
      %p160 = scmp.lt.s32.totalorder %s159, 31
      %s161 = scalar_select %p160, %s159, 31
      %s162 = smul.addr %s161, 8
      %s163 = scalar_lea.vmem %s3, %s162
      %s164 = smul.u32 8, %s14
      %p165 = scmp.lt.s32.totalorder %s164, 31
      %s166 = scalar_select %p165, %s164, 31
      %s167 = smul.addr %s166, 2
      %s168 = smul.addr %s167, 4
      %s169 = scalar_lea.vmem %s2, %s168
      %s170 = smul.u32 8, %s14
      %s171 = smul.u32 8, %s14
      %p172 = scmp.lt.s32.totalorder %s171, 31
      %s173 = scalar_select %p172, %s171, 31
      %s174 = smul.addr %s173, 8
      %s175 = scalar_lea.vmem %s3, %s174
      %s176 = smul.u32 8, %s14
      %v178 = vld [vmem:[%s0] sm:$0xff]
      %v179 = vld [vmem:[%s0 + $0x8] sm:$0xff]
      %v180 = vld [vmem:[%s0 + $0x10] sm:$0xff]
      %v181 = vld [vmem:[%s0 + $0x18] sm:$0xff]
      %v182 = vld [vmem:[%s0 + $0x20] sm:$0xff]
      %v183 = vld [vmem:[%s0 + $0x28] sm:$0xff]
      %v184 = vld [vmem:[%s0 + $0x30] sm:$0xff]
      %v185 = vld [vmem:[%s0 + $0x38] sm:$0xff]
      %v186 = vld [vmem:[%s0 + $0x40] sm:$0xff]
      %v187 = vld [vmem:[%s0 + $0x48] sm:$0xff]
      %v188 = vld [vmem:[%s0 + $0x50] sm:$0xff]
      %v189 = vld [vmem:[%s0 + $0x58] sm:$0xff]
      %v190 = vld [vmem:[%s0 + $0x60] sm:$0xff]
      %v191 = vld [vmem:[%s0 + $0x68] sm:$0xff]
      %v192 = vld [vmem:[%s0 + $0x70] sm:$0xff]
      %v193 = vld [vmem:[%s0 + $0x78] sm:$0xff]
      %v194 = vld [vmem:[%s0 + $0x80] sm:$0xff]
      %v195 = vld [vmem:[%s0 + $0x88] sm:$0xff]
      %v196 = vld [vmem:[%s0 + $0x90] sm:$0xff]
      %v197 = vld [vmem:[%s0 + $0x98] sm:$0xff]
      %v198 = vld [vmem:[%s0 + $0xa0] sm:$0xff]
      %v199 = vld [vmem:[%s0 + $0xa8] sm:$0xff]
      %v200 = vld [vmem:[%s0 + $0xb0] sm:$0xff]
      %v201 = vld [vmem:[%s0 + $0xb8] sm:$0xff]
      %v202 = vld [vmem:[%s0 + $0xc0] sm:$0xff]
      %v203 = vld [vmem:[%s0 + $0xc8] sm:$0xff]
      %v204 = vld [vmem:[%s0 + $0xd0] sm:$0xff]
      %v205 = vld [vmem:[%s0 + $0xd8] sm:$0xff]
      %v206 = vld [vmem:[%s0 + $0xe0] sm:$0xff]
      %v207 = vld [vmem:[%s0 + $0xe8] sm:$0xff]
      %v208 = vld [vmem:[%s0 + $0xf0] sm:$0xff]
      %v209 = vld [vmem:[%s0 + $0xf8] sm:$0xff]
      %v210 = vld [vmem:[%s1] sm:$0xff]
      %v211 = vld [vmem:[%s1 + $0x8] sm:$0xff]
      %v212 = vld [vmem:[%s1 + $0x10] sm:$0xff]
      %v213 = vld [vmem:[%s1 + $0x18] sm:$0xff]
      %vm214 = vcmask 261120
      %v216 = vsel %vm214, %v178, 0
      %v219 = vsel %vm214, %v179, 0
      %v222 = vsel %vm214, %v180, 0
      %v225 = vsel %vm214, %v181, 0
      %v228 = vsel %vm214, %v182, 0
      %v231 = vsel %vm214, %v183, 0
      %v234 = vsel %vm214, %v184, 0
      %v237 = vsel %vm214, %v185, 0
      %v240 = vsel %vm214, %v186, 0
      %v243 = vsel %vm214, %v187, 0
      %v246 = vsel %vm214, %v188, 0
      %v249 = vsel %vm214, %v189, 0
      %v252 = vsel %vm214, %v190, 0
      %v255 = vsel %vm214, %v191, 0
      %v258 = vsel %vm214, %v192, 0
      %v261 = vsel %vm214, %v193, 0
      %v264 = vsel %vm214, %v194, 0
      %v267 = vsel %vm214, %v195, 0
      %v270 = vsel %vm214, %v196, 0
      %v273 = vsel %vm214, %v197, 0
      %v276 = vsel %vm214, %v198, 0
      %v279 = vsel %vm214, %v199, 0
      %v282 = vsel %vm214, %v200, 0
      %v285 = vsel %vm214, %v201, 0
      %v288 = vsel %vm214, %v202, 0
      %v291 = vsel %vm214, %v203, 0
      %v294 = vsel %vm214, %v204, 0
      %v297 = vsel %vm214, %v205, 0
      %v300 = vsel %vm214, %v206, 0
      %v303 = vsel %vm214, %v207, 0
      %v306 = vsel %vm214, %v208, 0
      %v309 = vsel %vm214, %v209, 0
      %311 = vmatprep.subr.mxu0 0.0
      %312 = vmatpush1.msra.mxu0 %v210
      %313 = vmatprep.subr.mxu0 0.0
      %314 = vmatpush1.msra.mxu0 %v211
      %315 = vmatprep.subr.mxu0 0.0
      %316 = vmatpush1.msra.mxu0 %v212
      %317 = vmatprep.subr.mxu0 0.0
      %318 = vmatpush1.msra.mxu0 %v213
      %319 = vmatprep.subr.mxu0 0.0
      %320 = vmatpush1.msra.mxu0 0.0
      %321 = vmatprep.subr.mxu0 0.0
      %322 = vmatpush1.msra.mxu0 0.0
      %323 = vmatprep.subr.mxu0 0.0
      %324 = vmatpush1.msra.mxu0 0.0
      %325 = vmatprep.subr.mxu0 0.0
      %326 = vmatpush1.msra.mxu0 0.0
      %327 = vmatprep.subr.mxu0 0.0
      %328 = vmatpush1.msra.mxu0 0.0
      %329 = vmatprep.subr.mxu0 0.0
      %330 = vmatpush1.msra.mxu0 0.0
      %331 = vmatprep.subr.mxu0 0.0
      %332 = vmatpush1.msra.mxu0 0.0
      %333 = vmatprep.subr.mxu0 0.0
      %334 = vmatpush1.msra.mxu0 0.0
      %335 = vmatprep.subr.mxu0 0.0
      %336 = vmatpush1.msra.mxu0 0.0
      %337 = vmatprep.subr.mxu0 0.0
      %338 = vmatpush1.msra.mxu0 0.0
      %339 = vmatprep.subr.mxu0 0.0
      %340 = vmatpush1.msra.mxu0 0.0
      %341 = vmatprep.subr.mxu0 0.0
      %342 = vmatpush1.msra.mxu0 0.0
      %343 = vmatprep.subr.mxu0 0.0
      %344 = vmatpush1.msra.mxu0 0.0
      %345 = vmatprep.subr.mxu0 0.0
      %346 = vmatpush1.msra.mxu0 0.0
      %347 = vmatprep.subr.mxu0 0.0
      %348 = vmatpush1.msra.mxu0 0.0
      %349 = vmatprep.subr.mxu0 0.0
      %350 = vmatpush1.msra.mxu0 0.0
      %351 = vmatprep.subr.mxu0 0.0
      %352 = vmatpush1.msra.mxu0 0.0
      %353 = vmatprep.subr.mxu0 0.0
      %354 = vmatpush1.msra.mxu0 0.0
      %355 = vmatprep.subr.mxu0 0.0
      %356 = vmatpush1.msra.mxu0 0.0
      %357 = vmatprep.subr.mxu0 0.0
      %358 = vmatpush1.msra.mxu0 0.0
      %359 = vmatprep.subr.mxu0 0.0
      %360 = vmatpush1.msra.mxu0 0.0
      %361 = vmatprep.subr.mxu0 0.0
      %362 = vmatpush1.msra.mxu0 0.0
      %363 = vmatprep.subr.mxu0 0.0
      %364 = vmatpush1.msra.mxu0 0.0
      %365 = vmatprep.subr.mxu0 0.0
      %366 = vmatpush1.msra.mxu0 0.0
      %367 = vmatprep.subr.mxu0 0.0
      %368 = vmatpush1.msra.mxu0 0.0
      %369 = vmatprep.subr.mxu0 0.0
      %370 = vmatpush1.msra.mxu0 0.0
      %371 = vmatprep.subr.mxu0 0.0
      %372 = vmatpush1.msra.mxu0 0.0
      %373 = vmatprep.subr.mxu0 0.0
      %374 = vmatpush1.msra.mxu0 0.0
      %375 = vmatprep.mubr.f32.mxu0 0.0
      %376 = vmatmul.mubr.f32.gmra.mrb[0].mxu0 %v216
      %v377 = vpop.f32.mrb[0].mxu0
      %v378 = vadd.f32 0.0, %v377
      %v379 = vpop.f32.mrb[0].mxu0
      %380 = vmatprep.mubr.f32.mxu0 0.0
      %381 = vmatmul.mubr.f32.gmra.mrb[0].mxu0 %v219
      %v382 = vpop.f32.mrb[0].mxu0
      %v383 = vadd.f32 0.0, %v382
      %v384 = vpop.f32.mrb[0].mxu0
      %385 = vmatprep.mubr.f32.mxu0 0.0
      %386 = vmatmul.mubr.f32.gmra.mrb[0].mxu0 %v222
      %v387 = vpop.f32.mrb[0].mxu0
      %v388 = vadd.f32 0.0, %v387
      %v389 = vpop.f32.mrb[0].mxu0
      %390 = vmatprep.mubr.f32.mxu0 0.0
      %391 = vmatmul.mubr.f32.gmra.mrb[0].mxu0 %v225
      %v392 = vpop.f32.mrb[0].mxu0
      %v393 = vadd.f32 0.0, %v392
      %v394 = vpop.f32.mrb[0].mxu0
      %395 = vmatprep.mubr.f32.mxu0 0.0
      %396 = vmatmul.mubr.f32.gmra.mrb[0].mxu0 %v228
      %v397 = vpop.f32.mrb[0].mxu0
      %v398 = vadd.f32 0.0, %v397
      %v399 = vpop.f32.mrb[0].mxu0
      %400 = vmatprep.mubr.f32.mxu0 0.0
      %401 = vmatmul.mubr.f32.gmra.mrb[0].mxu0 %v231
      %v402 = vpop.f32.mrb[0].mxu0
      %v403 = vadd.f32 0.0, %v402
      %v404 = vpop.f32.mrb[0].mxu0
      %405 = vmatprep.mubr.f32.mxu0 0.0
      %406 = vmatmul.mubr.f32.gmra.mrb[0].mxu0 %v234
      %v407 = vpop.f32.mrb[0].mxu0
      %v408 = vadd.f32 0.0, %v407
      %v409 = vpop.f32.mrb[0].mxu0
      %410 = vmatprep.mubr.f32.mxu0 0.0
      %411 = vmatmul.mubr.f32.gmra.mrb[0].mxu0 %v237
      %v412 = vpop.f32.mrb[0].mxu0
      %v413 = vadd.f32 0.0, %v412
      %v414 = vpop.f32.mrb[0].mxu0
      %415 = vmatprep.mubr.f32.mxu0 0.0
      %416 = vmatmul.mubr.f32.gmra.mrb[0].mxu0 %v240
      %v417 = vpop.f32.mrb[0].mxu0
      %v418 = vadd.f32 0.0, %v417
      %v419 = vpop.f32.mrb[0].mxu0
      %420 = vmatprep.mubr.f32.mxu0 0.0
      %421 = vmatmul.mubr.f32.gmra.mrb[0].mxu0 %v243
      %v422 = vpop.f32.mrb[0].mxu0
      %v423 = vadd.f32 0.0, %v422
      %v424 = vpop.f32.mrb[0].mxu0
      %425 = vmatprep.mubr.f32.mxu0 0.0
      %426 = vmatmul.mubr.f32.gmra.mrb[0].mxu0 %v246
      %v427 = vpop.f32.mrb[0].mxu0
      %v428 = vadd.f32 0.0, %v427
      %v429 = vpop.f32.mrb[0].mxu0
      %430 = vmatprep.mubr.f32.mxu0 0.0
      %431 = vmatmul.mubr.f32.gmra.mrb[0].mxu0 %v249
      %v432 = vpop.f32.mrb[0].mxu0
      %v433 = vadd.f32 0.0, %v432
      %v434 = vpop.f32.mrb[0].mxu0
      %435 = vmatprep.mubr.f32.mxu0 0.0
      %436 = vmatmul.mubr.f32.gmra.mrb[0].mxu0 %v252
      %v437 = vpop.f32.mrb[0].mxu0
      %v438 = vadd.f32 0.0, %v437
      %v439 = vpop.f32.mrb[0].mxu0
      %440 = vmatprep.mubr.f32.mxu0 0.0
      %441 = vmatmul.mubr.f32.gmra.mrb[0].mxu0 %v255
      %v442 = vpop.f32.mrb[0].mxu0
      %v443 = vadd.f32 0.0, %v442
      %v444 = vpop.f32.mrb[0].mxu0
      %445 = vmatprep.mubr.f32.mxu0 0.0
      %446 = vmatmul.mubr.f32.gmra.mrb[0].mxu0 %v258
      %v447 = vpop.f32.mrb[0].mxu0
      %v448 = vadd.f32 0.0, %v447
      %v449 = vpop.f32.mrb[0].mxu0
      %450 = vmatprep.mubr.f32.mxu0 0.0
      %451 = vmatmul.mubr.f32.gmra.mrb[0].mxu0 %v261
      %v452 = vpop.f32.mrb[0].mxu0
      %v453 = vadd.f32 0.0, %v452
      %v454 = vpop.f32.mrb[0].mxu0
      %455 = vmatprep.mubr.f32.mxu0 0.0
      %456 = vmatmul.mubr.f32.gmra.mrb[0].mxu0 %v264
      %v457 = vpop.f32.mrb[0].mxu0
      %v458 = vadd.f32 0.0, %v457
      %v459 = vpop.f32.mrb[0].mxu0
      %460 = vmatprep.mubr.f32.mxu0 0.0
      %461 = vmatmul.mubr.f32.gmra.mrb[0].mxu0 %v267
      %v462 = vpop.f32.mrb[0].mxu0
      %v463 = vadd.f32 0.0, %v462
      %v464 = vpop.f32.mrb[0].mxu0
      %465 = vmatprep.mubr.f32.mxu0 0.0
      %466 = vmatmul.mubr.f32.gmra.mrb[0].mxu0 %v270
      %v467 = vpop.f32.mrb[0].mxu0
      %v468 = vadd.f32 0.0, %v467
      %v469 = vpop.f32.mrb[0].mxu0
      %470 = vmatprep.mubr.f32.mxu0 0.0
      %471 = vmatmul.mubr.f32.gmra.mrb[0].mxu0 %v273
      %v472 = vpop.f32.mrb[0].mxu0
      %v473 = vadd.f32 0.0, %v472
      %v474 = vpop.f32.mrb[0].mxu0
      %475 = vmatprep.mubr.f32.mxu0 0.0
      %476 = vmatmul.mubr.f32.gmra.mrb[0].mxu0 %v276
      %v477 = vpop.f32.mrb[0].mxu0
      %v478 = vadd.f32 0.0, %v477
      %v479 = vpop.f32.mrb[0].mxu0
      %480 = vmatprep.mubr.f32.mxu0 0.0
      %481 = vmatmul.mubr.f32.gmra.mrb[0].mxu0 %v279
      %v482 = vpop.f32.mrb[0].mxu0
      %v483 = vadd.f32 0.0, %v482
      %v484 = vpop.f32.mrb[0].mxu0
      %485 = vmatprep.mubr.f32.mxu0 0.0
      %486 = vmatmul.mubr.f32.gmra.mrb[0].mxu0 %v282
      %v487 = vpop.f32.mrb[0].mxu0
      %v488 = vadd.f32 0.0, %v487
      %v489 = vpop.f32.mrb[0].mxu0
      %490 = vmatprep.mubr.f32.mxu0 0.0
      %491 = vmatmul.mubr.f32.gmra.mrb[0].mxu0 %v285
      %v492 = vpop.f32.mrb[0].mxu0
      %v493 = vadd.f32 0.0, %v492
      %v494 = vpop.f32.mrb[0].mxu0
      %495 = vmatprep.mubr.f32.mxu0 0.0
      %496 = vmatmul.mubr.f32.gmra.mrb[0].mxu0 %v288
      %v497 = vpop.f32.mrb[0].mxu0
      %v498 = vadd.f32 0.0, %v497
      %v499 = vpop.f32.mrb[0].mxu0
      %500 = vmatprep.mubr.f32.mxu0 0.0
      %501 = vmatmul.mubr.f32.gmra.mrb[0].mxu0 %v291
      %v502 = vpop.f32.mrb[0].mxu0
      %v503 = vadd.f32 0.0, %v502
      %v504 = vpop.f32.mrb[0].mxu0
      %505 = vmatprep.mubr.f32.mxu0 0.0
      %506 = vmatmul.mubr.f32.gmra.mrb[0].mxu0 %v294
      %v507 = vpop.f32.mrb[0].mxu0
      %v508 = vadd.f32 0.0, %v507
      %v509 = vpop.f32.mrb[0].mxu0
      %510 = vmatprep.mubr.f32.mxu0 0.0
      %511 = vmatmul.mubr.f32.gmra.mrb[0].mxu0 %v297
      %v512 = vpop.f32.mrb[0].mxu0
      %v513 = vadd.f32 0.0, %v512
      %v514 = vpop.f32.mrb[0].mxu0
      %515 = vmatprep.mubr.f32.mxu0 0.0
      %516 = vmatmul.mubr.f32.gmra.mrb[0].mxu0 %v300
      %v517 = vpop.f32.mrb[0].mxu0
      %v518 = vadd.f32 0.0, %v517
      %v519 = vpop.f32.mrb[0].mxu0
      %520 = vmatprep.mubr.f32.mxu0 0.0
      %521 = vmatmul.mubr.f32.gmra.mrb[0].mxu0 %v303
      %v522 = vpop.f32.mrb[0].mxu0
      %v523 = vadd.f32 0.0, %v522
      %v524 = vpop.f32.mrb[0].mxu0
      %525 = vmatprep.mubr.f32.mxu0 0.0
      %526 = vmatmul.mubr.f32.gmra.mrb[0].mxu0 %v306
      %v527 = vpop.f32.mrb[0].mxu0
      %v528 = vadd.f32 0.0, %v527
      %v529 = vpop.f32.mrb[0].mxu0
      %530 = vmatprep.mubr.f32.mxu0 0.0
      %531 = vmatmul.mubr.f32.gmra.mrb[0].mxu0 %v309
      %v532 = vpop.f32.mrb[0].mxu0
      %v533 = vadd.f32 0.0, %v532
      %v534 = vpop.f32.mrb[0].mxu0
      %535 = vdwg.mxu0
      %v536 = vtanh.pop %v378
      %v537 = vtanh.pop %v383
      %v538 = vtanh.pop %v388
      %v539 = vtanh.pop %v393
      %v540 = vtanh.pop %v398
      %v541 = vtanh.pop %v403
      %v542 = vtanh.pop %v408
      %v543 = vtanh.pop %v413
      %v544 = vtanh.pop %v418
      %v545 = vtanh.pop %v423
      %v546 = vtanh.pop %v428
      %v547 = vtanh.pop %v433
      %v548 = vtanh.pop %v438
      %v549 = vtanh.pop %v443
      %v550 = vtanh.pop %v448
      %v551 = vtanh.pop %v453
      %v552 = vtanh.pop %v458
      %v553 = vtanh.pop %v463
      %v554 = vtanh.pop %v468
      %v555 = vtanh.pop %v473
      %v556 = vtanh.pop %v478
      %v557 = vtanh.pop %v483
      %v558 = vtanh.pop %v488
      %v559 = vtanh.pop %v493
      %v560 = vtanh.pop %v498
      %v561 = vtanh.pop %v503
      %v562 = vtanh.pop %v508
      %v563 = vtanh.pop %v513
      %v564 = vtanh.pop %v518
      %v565 = vtanh.pop %v523
      %v566 = vtanh.pop %v528
      %v567 = vtanh.pop %v533
      %v568 = vld [vmem:[%s169] sm:$0xff]
      %v569 = vld [vmem:[%s169 + $0x8] sm:$0xff]
      %v570 = vld [vmem:[%s169 + $0x10] sm:$0xff]
      %v571 = vld [vmem:[%s169 + $0x18] sm:$0xff]
      %v572 = vld [vmem:[%s169 + $0x20] sm:$0xff]
      %v573 = vld [vmem:[%s169 + $0x28] sm:$0xff]
      %v574 = vld [vmem:[%s169 + $0x30] sm:$0xff]
      %v575 = vld [vmem:[%s169 + $0x38] sm:$0xff]
      %v576 = vpack.c.bf16 %v537, %v536
      %v577 = vpack.c.bf16 %v539, %v538
      %v578 = vpack.c.bf16 %v541, %v540
      %v579 = vpack.c.bf16 %v543, %v542
      %v580 = vpack.c.bf16 %v545, %v544
      %v581 = vpack.c.bf16 %v547, %v546
      %v582 = vpack.c.bf16 %v549, %v548
      %v583 = vpack.c.bf16 %v551, %v550
      %v584 = vpack.c.bf16 %v553, %v552
      %v585 = vpack.c.bf16 %v555, %v554
      %v586 = vpack.c.bf16 %v557, %v556
      %v587 = vpack.c.bf16 %v559, %v558
      %v588 = vpack.c.bf16 %v561, %v560
      %v589 = vpack.c.bf16 %v563, %v562
      %v590 = vpack.c.bf16 %v565, %v564
      %v591 = vpack.c.bf16 %v567, %v566
      %v600 = vunpack.c.l.b16 %v568
      %v601 = vunpack.c.h.b16 %v568
      %v602 = vunpack.c.l.b16 %v569
      %v603 = vunpack.c.h.b16 %v569
      %v604 = vunpack.c.l.b16 %v570
      %v605 = vunpack.c.h.b16 %v570
      %v606 = vunpack.c.l.b16 %v571
      %v607 = vunpack.c.h.b16 %v571
      %v608 = vunpack.c.l.b16 %v572
      %v609 = vunpack.c.h.b16 %v572
      %v610 = vunpack.c.l.b16 %v573
      %v611 = vunpack.c.h.b16 %v573
      %v612 = vunpack.c.l.b16 %v574
      %v613 = vunpack.c.h.b16 %v574
      %v614 = vunpack.c.l.b16 %v575
      %v615 = vunpack.c.h.b16 %v575
      %v616 = vpack.c.b16 %v602, %v600
      %v617 = vpack.c.b16 %v603, %v601
      %v618 = vpack.c.b16 %v606, %v604
      %v619 = vpack.c.b16 %v607, %v605
      %v620 = vpack.c.b16 %v610, %v608
      %v621 = vpack.c.b16 %v611, %v609
      %v622 = vpack.c.b16 %v614, %v612
      %v623 = vpack.c.b16 %v615, %v613
      %632 = vmatprep.subr.bf16.mxu0 0
      %633 = vmatpush1.bf16.msra.mxu0 %v576
      %634 = vmatprep.subr.bf16.mxu0 0
      %635 = vmatpush1.bf16.msra.mxu0 %v577
      %636 = vmatprep.subr.bf16.mxu0 0
      %637 = vmatpush1.bf16.msra.mxu0 %v578
      %638 = vmatprep.subr.bf16.mxu0 0
      %639 = vmatpush1.bf16.msra.mxu0 %v579
      %640 = vmatprep.subr.bf16.mxu0 0
      %641 = vmatpush1.bf16.msra.mxu0 %v580
      %642 = vmatprep.subr.bf16.mxu0 0
      %643 = vmatpush1.bf16.msra.mxu0 %v581
      %644 = vmatprep.subr.bf16.mxu0 0
      %645 = vmatpush1.bf16.msra.mxu0 %v582
      %646 = vmatprep.subr.bf16.mxu0 0
      %647 = vmatpush1.bf16.msra.mxu0 %v583
      %648 = vmatprep.subr.bf16.mxu0 0
      %649 = vmatpush1.bf16.msra.mxu0 %v584
      %650 = vmatprep.subr.bf16.mxu0 0
      %651 = vmatpush1.bf16.msra.mxu0 %v585
      %652 = vmatprep.subr.bf16.mxu0 0
      %653 = vmatpush1.bf16.msra.mxu0 %v586
      %654 = vmatprep.subr.bf16.mxu0 0
      %655 = vmatpush1.bf16.msra.mxu0 %v587
      %656 = vmatprep.subr.bf16.mxu0 0
      %657 = vmatpush1.bf16.msra.mxu0 %v588
      %658 = vmatprep.subr.bf16.mxu0 0
      %659 = vmatpush1.bf16.msra.mxu0 %v589
      %660 = vmatprep.subr.bf16.mxu0 0
      %661 = vmatpush1.bf16.msra.mxu0 %v590
      %662 = vmatprep.subr.bf16.mxu0 0
      %663 = vmatpush1.bf16.msra.mxu0 %v591
      %664 = vmatprep.mubr.bf16.mxu0 %v617
      %665 = vmatmul.mubr.bf16.gmra.mrb[0].mxu0 %v616
      %v666 = vpop.f32.mrb[0].mxu0
      %v667 = vadd.f32 0.0, %v666
      %v668 = vpop.f32.mrb[0].mxu0
      %v669 = vpop.f32.mrb[0].mxu0
      %v670 = vadd.f32 0.0, %v669
      %v671 = vpop.f32.mrb[0].mxu0
      %672 = vmatprep.mubr.bf16.mxu0 %v619
      %673 = vmatmul.mubr.bf16.gmra.mrb[0].mxu0 %v618
      %v674 = vpop.f32.mrb[0].mxu0
      %v675 = vadd.f32 0.0, %v674
      %v676 = vpop.f32.mrb[0].mxu0
      %v677 = vpop.f32.mrb[0].mxu0
      %v678 = vadd.f32 0.0, %v677
      %v679 = vpop.f32.mrb[0].mxu0
      %680 = vmatprep.mubr.bf16.mxu0 %v621
      %681 = vmatmul.mubr.bf16.gmra.mrb[0].mxu0 %v620
      %v682 = vpop.f32.mrb[0].mxu0
      %v683 = vadd.f32 0.0, %v682
      %v684 = vpop.f32.mrb[0].mxu0
      %v685 = vpop.f32.mrb[0].mxu0
      %v686 = vadd.f32 0.0, %v685
      %v687 = vpop.f32.mrb[0].mxu0
      %688 = vmatprep.mubr.bf16.mxu0 %v623
      %689 = vmatmul.mubr.bf16.gmra.mrb[0].mxu0 %v622
      %v690 = vpop.f32.mrb[0].mxu0
      %v691 = vadd.f32 0.0, %v690
      %v692 = vpop.f32.mrb[0].mxu0
      %v693 = vpop.f32.mrb[0].mxu0
      %v694 = vadd.f32 0.0, %v693
      %v695 = vpop.f32.mrb[0].mxu0
      %696 = vdwg.mxu0
      %697 = vst.msk [vmem:[%s175] sm:$0xff] %vm214, %v667
      %698 = vst.msk [vmem:[%s175 + $0x8] sm:$0xff] %vm214, %v670
      %699 = vst.msk [vmem:[%s175 + $0x10] sm:$0xff] %vm214, %v675
      %700 = vst.msk [vmem:[%s175 + $0x18] sm:$0xff] %vm214, %v678
      %701 = vst.msk [vmem:[%s175 + $0x20] sm:$0xff] %vm214, %v683
      %702 = vst.msk [vmem:[%s175 + $0x28] sm:$0xff] %vm214, %v686
      %703 = vst.msk [vmem:[%s175 + $0x30] sm:$0xff] %vm214, %v691
      %704 = vst.msk [vmem:[%s175 + $0x38] sm:$0xff] %vm214, %v694
      %s705 = smul.u32 8, %s14
      %p706 = scmp.lt.s32.totalorder %s705, 31
      %s707 = scalar_select %p706, %s705, 31
      %s708 = smul.addr %s707, 8
      %s709 = scalar_lea.vmem %s3, %s708
      // Predicated region
      $region33: #{tpu_custom_call.1} parent=31 // pred_check
        %p710 = pneg %p100
      $region34: #{tpu_custom_call.1} parent=31 // pred_check_branch
        %712 = sbr.rel (%p710) target = $region36
      $region35: #{tpu_custom_call.1} parent=31 // pred_region
        %s713 = smul.u32 8, %s14
      $region36: #{tpu_custom_call.1} parent=31 // pred_fallthru
        _
    $region32: #{tpu_custom_call.1} parent=5 // pred_fallthru
      _
    %p714 = scmp.le.s32.totalorder 2, %s9
    // Predicated region
    $region37: #{tpu_custom_call.1} parent=5 // pred_check
      %p715 = pneg %p714
    $region38: #{tpu_custom_call.1} parent=5 // pred_check_branch
      %717 = sbr.rel (%p715) target = $region40
    $region39: #{tpu_custom_call.1} parent=5 // pred_region
      %s718 = ssub.s32 %s9, 2
      // Predicated region
      $region41: #{tpu_custom_call.1} parent=39 // pred_check
        %p719 = pneg %p106
      $region42: #{tpu_custom_call.1} parent=39 // pred_check_branch
        %721 = sbr.rel (%p719) target = $region44
      $region43: #{tpu_custom_call.1} parent=39 // pred_region
        %s722 = smul.u32 8, %s15
        %p723 = scmp.lt.s32.totalorder %s722, 31
        %s724 = scalar_select %p723, %s722, 31
        %s725 = smul.addr %s724, 8
        %s726 = scalar_lea.vmem %s3, %s725
      $region44: #{tpu_custom_call.1} parent=39 // pred_fallthru
        _
    $region40: #{tpu_custom_call.1} parent=5 // pred_fallthru
      _
  $region6: #{tpu_custom_call.1} parent=0 // loop_footer
    %s13 = sadd.s32 1, %s9
  $region7: #{tpu_custom_call.1} parent=0 // loop_footer_branch
    %8 = sbr.rel target = $region3
  $region8: #{tpu_custom_call.1} parent=0 // loop_exit
    _

</llo_original>
